<compile_context>
chip_gen: v7x
topology: tpu7x:2x2x1
jax: 0.10.0
libtpu: 0.0.40
codegen_flags: <defaults>
</compile_context>

<pallas_src>
import jax
import jax.numpy as jnp
from jax.experimental import pallas as pl
from jax.experimental.pallas import tpu as pltpu


HIDDEN = 64                  # per-network hidden width (PyTorch spec)
FUSED_HIDDEN = 2 * HIDDEN    # 128: [actor | critic] -> exactly one vreg lane span
OUT_WIDTH = 128              # lane-padded output slab width


def _round_up(x, m):
    return ((x + m - 1) // m) * m


def _select_tile(batch, max_tile):
    """Pick (tile_b, padded_batch).

    Prefers (a) a single grid step when the 8-row-aligned batch fits under the
    cap, else (b) the largest multiple-of-8 divisor of the aligned batch that
    fits (no pad copy), else (c) falls back to padding to a multiple of the
    cap (rare awkward batch sizes, where grid overhead would otherwise blow up).
    """
    max_tile = max(8, _round_up(max_tile, 8))
    b8 = _round_up(batch, 8)
    if b8 <= max_tile:
        return b8, b8                       # one grid step, pad <= 7 rows
    best = 8
    m = b8 // 8
    d = 1
    while d * d <= m:
        if m % d == 0:
            for dd in (d, m // d):
                t = 8 * dd
                if t <= max_tile and t > best:
                    best = t
        d += 1
    if best * 4 >= max_tile:                # divisor tile large enough: no pad
        return best, b8
    return max_tile, _round_up(batch, max_tile)


def actor_critic_kernel(obs_ref, w1_ref, b1_ref, w2_ref, b2_ref, w3_ref, b3_ref,
                        out_ref):
    """One batch tile: 3 fused (block-diagonal) matmuls + 2 tanh."""
    wdt = w1_ref.dtype
    x = obs_ref[...]                                   # already in weight dtype

    # layer 1: [h | g] = tanh(obs @ [aw1 | cw1] + [ab1 | cb1])       -> (TB, 128)
    hg = jnp.dot(x, w1_ref[...], preferred_element_type=jnp.float32) + b1_ref[...]
    hg = jnp.tanh(hg)                                  # f32 tanh (v5e-safe)
    # layer 2: block-diagonal (128, 128)
    hg = jnp.dot(hg.astype(wdt), w2_ref[...],
                 preferred_element_type=jnp.float32) + b2_ref[...]
    hg = jnp.tanh(hg)
    # layer 3: block-diagonal, lane-padded -> [mu | value | zeros]   -> (TB, 128)
    out = jnp.dot(hg.astype(wdt), w3_ref[...],
                  preferred_element_type=jnp.float32) + b3_ref[...]
    out_ref[...] = out.astype(out_ref.dtype)           # bf16 store halves writeback


def init_params(key, obs_dim, act_dim, hidden=HIDDEN):
    """Deterministic init mimicking nn.Linear default (U(-1/sqrt(fan_in), +)).

    Weights stored (in_features, out_features) so forward is x @ W + b.
    """
    def linear(k, fan_in, fan_out):
        kw, kb = jax.random.split(k)
        bound = 1.0 / jnp.sqrt(fan_in)
        w = jax.random.uniform(kw, (fan_in, fan_out), jnp.float32, -bound, bound)
        b = jax.random.uniform(kb, (1, fan_out), jnp.float32, -bound, bound)
        return w, b

    keys = jax.random.split(key, 6)
    aw1, ab1 = linear(keys[0], obs_dim, hidden)
    aw2, ab2 = linear(keys[1], hidden, hidden)
    aw3, ab3 = linear(keys[2], hidden, act_dim)
    cw1, cb1 = linear(keys[3], obs_dim, hidden)
    cw2, cb2 = linear(keys[4], hidden, hidden)
    cw3, cb3 = linear(keys[5], hidden, 1)
    log_std = jnp.zeros((act_dim,), jnp.float32)   # nn.Parameter(torch.zeros(act_dim))
    return dict(
        aw1=aw1, ab1=ab1, aw2=aw2, ab2=ab2, aw3=aw3, ab3=ab3,
        cw1=cw1, cb1=cb1, cw2=cw2, cb2=cb2, cw3=cw3, cb3=cb3,
        log_std=log_std,
    )


def fuse_params(p, act_dim, hidden=HIDDEN, out_width=OUT_WIDTH,
                weight_dtype=jnp.bfloat16):
    """Build the fused block-diagonal / lane-padded weights (once per update).

    bf16 weights are the default on ALL TPU generations (MXU is bf16-native on
    v5e/v6e/v7x); biases stay f32 so bias-add/tanh run in f32.  Pass
    weight_dtype=jnp.float32 for bit-tight results (e.g. unit tests).
    """
    assert out_width >= act_dim + 1
    # layer 1: concat along the output dim -> one (obs_dim, 128) matmul
    w1 = jnp.concatenate([p["aw1"], p["cw1"]], axis=1).astype(weight_dtype)
    b1 = jnp.concatenate([p["ab1"], p["cb1"]], axis=1).astype(jnp.float32)
    # layer 2: block-diagonal (128, 128)
    w2 = jnp.zeros((2 * hidden, 2 * hidden), jnp.float32)
    w2 = w2.at[:hidden, :hidden].set(p["aw2"]).at[hidden:, hidden:].set(p["cw2"])
    w2 = w2.astype(weight_dtype)
    b2 = jnp.concatenate([p["ab2"], p["cb2"]], axis=1).astype(jnp.float32)
    # layer 3: block-diagonal, zero-padded to a lane-dense 128-wide output
    w3 = jnp.zeros((2 * hidden, out_width), jnp.float32)
    w3 = w3.at[:hidden, :act_dim].set(p["aw3"])
    w3 = w3.at[hidden:, act_dim:act_dim + 1].set(p["cw3"])
    w3 = w3.astype(weight_dtype)
    b3 = jnp.zeros((1, out_width), jnp.float32)
    b3 = b3.at[:, :act_dim].set(p["ab3"])
    b3 = b3.at[:, act_dim:act_dim + 1].set(p["cb3"])
    return dict(w1=w1, b1=b1, w2=w2, b2=b2, w3=w3, b3=b3)


def actor_critic_forward(obs, fused, log_std, *, max_tile_b=4096,
                         out_dtype=jnp.bfloat16, core_parallel=False):
    """Runs the fused ActorCritic forward. Returns (mu, std, value) in f32."""
    B, obs_dim = obs.shape
    act_dim = log_std.shape[-1]
    hid = fused["w1"].shape[1]
    out_w = fused["w3"].shape[1]
    wdt = fused["w1"].dtype

    tile_b, b_pad = _select_tile(B, max_tile_b)
    if core_parallel and (b_pad // tile_b) < 2:
        # v7x: make sure there are >= 2 grid steps so both TensorCores get work.
        tile_b = _round_up((b_pad + 1) // 2, 8)
        b_pad = 2 * tile_b

    # Cast obs to the weight dtype in the wrapper (halves the obs HBM read for
    # bf16; removes the in-kernel cast), then pad only if needed.
    obs_c = obs.astype(wdt) if obs.dtype != wdt else obs
    obs_p = obs_c if b_pad == B else jnp.pad(obs_c, ((0, b_pad - B), (0, 0)))

    grid = (b_pad // tile_b,)
    const = lambda i: (0, 0)   # weights/biases stay VMEM-resident across steps

    if core_parallel:
        dim_sem = (pltpu.CORE_PARALLEL,)   # v7x: shard batch grid over 2 TCs
    else:
        dim_sem = ("parallel",)

    out = pl.pallas_call(
        actor_critic_kernel,
        out_shape=jax.ShapeDtypeStruct((b_pad, out_w), out_dtype),
        grid_spec=pltpu.PrefetchScalarGridSpec(
            num_scalar_prefetch=0,
            grid=grid,
            in_specs=[
                pl.BlockSpec((tile_b, obs_dim), lambda i: (i, 0)),   # obs tile
                pl.BlockSpec((obs_dim, hid), const),                 # w1 fused
                pl.BlockSpec((1, hid), const),                       # b1 fused
                pl.BlockSpec((hid, hid), const),                     # w2 block-diag
                pl.BlockSpec((1, hid), const),                       # b2 fused
                pl.BlockSpec((hid, out_w), const),                   # w3 block-diag (padded)
                pl.BlockSpec((1, out_w), const),                     # b3 (padded)
            ],
            out_specs=pl.BlockSpec((tile_b, out_w), lambda i: (i, 0)),
        ),
        compiler_params=pltpu.CompilerParams(
            dimension_semantics=dim_sem,
            # At tile_b<=8192 / bf16 the double-buffered tiles total < ~5 MiB,
            # well under every generation's default scoped-VMEM limit, so no
            # explicit vmem_limit_bytes is needed.
        ),
    )(obs_p, fused["w1"], fused["b1"], fused["w2"], fused["b2"],
      fused["w3"], fused["b3"])

    # Keep these slices in the same jit as the kernel so XLA fuses them.
    mu = out[:B, :act_dim].astype(jnp.float32)
    value = out[:B, act_dim:act_dim + 1].astype(jnp.float32)
    # std = exp(log_std) does not depend on obs -> plain JAX, outside the kernel.
    std = jnp.broadcast_to(jnp.exp(log_std), mu.shape)
    return mu, std, value


def reference_forward(obs, p):
    h = jnp.tanh(obs @ p["aw1"] + p["ab1"])
    h = jnp.tanh(h @ p["aw2"] + p["ab2"])
    mu = h @ p["aw3"] + p["ab3"]
    std = jnp.broadcast_to(jnp.exp(p["log_std"]), mu.shape)
    g = jnp.tanh(obs @ p["cw1"] + p["cb1"])
    g = jnp.tanh(g @ p["cw2"] + p["cb2"])
    value = g @ p["cw3"] + p["cb3"]
    return mu, std, value


if __name__ == "__main__":
    key = jax.random.PRNGKey(0)
    k_obs, k_par, k_obs2 = jax.random.split(key, 3)

    B, obs_dim, act_dim = 8, 16, 4
    obs = jax.random.normal(k_obs, (B, obs_dim), jnp.float32)
    params = init_params(k_par, obs_dim, act_dim)

    # --- Recommended fast path: bf16 weights + bf16 output slab -------------
    fused_bf16 = fuse_params(params, act_dim)                  # bf16 default
    fwd_fast = jax.jit(
        lambda o: actor_critic_forward(o, fused_bf16, params["log_std"]))
    mu, std, value = fwd_fast(obs)
    jax.block_until_ready((mu, std, value))

    mu_r, std_r, value_r = reference_forward(obs, params)
    assert mu.shape == (B, act_dim) and std.shape == (B, act_dim) and value.shape == (B, 1)
    assert jnp.allclose(mu, mu_r, atol=1e-1)      # bf16 weights + bf16 store
    assert jnp.allclose(std, std_r, atol=1e-6)    # std computed exactly in f32
    assert jnp.allclose(value, value_r, atol=1e-1)

    # --- Exact f32 path: exercises multi-step grid + ragged (non-multiple) B.
    fused_f32 = fuse_params(params, act_dim, weight_dtype=jnp.float32)
    B2 = 50
    obs2 = jax.random.normal(k_obs2, (B2, obs_dim), jnp.float32)
    fwd_exact = jax.jit(
        lambda o: actor_critic_forward(o, fused_f32, params["log_std"],
                                       max_tile_b=16, out_dtype=jnp.float32))
    mu2, std2, val2 = fwd_exact(obs2)
    jax.block_until_ready((mu2, std2, val2))

    mu2_r, std2_r, val2_r = reference_forward(obs2, params)
    assert mu2.shape == (B2, act_dim) and val2.shape == (B2, 1)
    assert jnp.allclose(mu2, mu2_r, atol=1e-5)
    assert jnp.allclose(std2, std2_r, atol=1e-6)
    assert jnp.allclose(val2, val2_r, atol=1e-5)

    print("KERNEL_OK")
</pallas_src>

<mosaic_0001>
module attributes {stable_mosaic.version = 11 : i64} {
  func.func @actor_critic_kernel(%arg0: i32, %arg1: memref<8x16xbf16, #tpu.memory_space<vmem>>, %arg2: memref<16x128xbf16, #tpu.memory_space<vmem>>, %arg3: memref<1x128xf32, #tpu.memory_space<vmem>>, %arg4: memref<128x128xbf16, #tpu.memory_space<vmem>>, %arg5: memref<1x128xf32, #tpu.memory_space<vmem>>, %arg6: memref<128x128xbf16, #tpu.memory_space<vmem>>, %arg7: memref<1x128xf32, #tpu.memory_space<vmem>>, %arg8: memref<8x128xbf16, #tpu.memory_space<vmem>>) attributes {dimension_semantics = [#tpu.dimension_semantics<parallel>], iteration_bounds = array<i64: 1>, scalar_prefetch = 0 : i64, scratch_operands = 0 : i64, tpu.core_type = #tpu.core_type<tc>, window_params = [{transform_indices = @transform_0, window_bounds = array<i64: 8, 16>}, {pipeline_mode = #tpu.pipeline_mode<synchronous>, transform_indices = @transform_1, window_bounds = array<i64: 16, 128>}, {pipeline_mode = #tpu.pipeline_mode<synchronous>, transform_indices = @transform_2, window_bounds = array<i64: 1, 128>}, {pipeline_mode = #tpu.pipeline_mode<synchronous>, transform_indices = @transform_3, window_bounds = array<i64: 128, 128>}, {pipeline_mode = #tpu.pipeline_mode<synchronous>, transform_indices = @transform_4, window_bounds = array<i64: 1, 128>}, {pipeline_mode = #tpu.pipeline_mode<synchronous>, transform_indices = @transform_5, window_bounds = array<i64: 128, 128>}, {pipeline_mode = #tpu.pipeline_mode<synchronous>, transform_indices = @transform_6, window_bounds = array<i64: 1, 128>}, {transform_indices = @transform_7, window_bounds = array<i64: 8, 128>}]} {
    %c0 = arith.constant 0 : index
    %c0_0 = arith.constant 0 : index
    %0 = vector.load %arg1[%c0, %c0_0] : memref<8x16xbf16, #tpu.memory_space<vmem>>, vector<8x16xbf16>
    %c0_1 = arith.constant 0 : index
    %c0_2 = arith.constant 0 : index
    %1 = vector.load %arg2[%c0_1, %c0_2] : memref<16x128xbf16, #tpu.memory_space<vmem>>, vector<16x128xbf16>
    %cst = arith.constant dense<0.000000e+00> : vector<8x128xf32>
    %2 = tpu.matmul %0, %1, %cst {dimension_numbers = #tpu.dot_dimension_numbers<[1], [0], [0], [1], [0, 0, 1, 1], [], []>} : vector<8x16xbf16>, vector<16x128xbf16>, vector<8x128xf32> -> vector<8x128xf32>
    %c0_3 = arith.constant 0 : index
    %c0_4 = arith.constant 0 : index
    %3 = vector.load %arg3[%c0_3, %c0_4] : memref<1x128xf32, #tpu.memory_space<vmem>>, vector<1x128xf32>
    %4 = vector.broadcast %3 : vector<1x128xf32> to vector<8x128xf32>
    %5 = arith.addf %2, %4 : vector<8x128xf32>
    %6 = math.tanh %5 : vector<8x128xf32>
    %7 = arith.truncf %6 : vector<8x128xf32> to vector<8x128xbf16>
    %c0_5 = arith.constant 0 : index
    %c0_6 = arith.constant 0 : index
    %8 = vector.load %arg4[%c0_5, %c0_6] : memref<128x128xbf16, #tpu.memory_space<vmem>>, vector<128x128xbf16>
    %cst_7 = arith.constant dense<0.000000e+00> : vector<8x128xf32>
    %9 = tpu.matmul %7, %8, %cst_7 {dimension_numbers = #tpu.dot_dimension_numbers<[1], [0], [0], [1], [0, 0, 1, 1], [], []>} : vector<8x128xbf16>, vector<128x128xbf16>, vector<8x128xf32> -> vector<8x128xf32>
    %c0_8 = arith.constant 0 : index
    %c0_9 = arith.constant 0 : index
    %10 = vector.load %arg5[%c0_8, %c0_9] : memref<1x128xf32, #tpu.memory_space<vmem>>, vector<1x128xf32>
    %11 = vector.broadcast %10 : vector<1x128xf32> to vector<8x128xf32>
    %12 = arith.addf %9, %11 : vector<8x128xf32>
    %13 = math.tanh %12 : vector<8x128xf32>
    %14 = arith.truncf %13 : vector<8x128xf32> to vector<8x128xbf16>
    %c0_10 = arith.constant 0 : index
    %c0_11 = arith.constant 0 : index
    %15 = vector.load %arg6[%c0_10, %c0_11] : memref<128x128xbf16, #tpu.memory_space<vmem>>, vector<128x128xbf16>
    %cst_12 = arith.constant dense<0.000000e+00> : vector<8x128xf32>
    %16 = tpu.matmul %14, %15, %cst_12 {dimension_numbers = #tpu.dot_dimension_numbers<[1], [0], [0], [1], [0, 0, 1, 1], [], []>} : vector<8x128xbf16>, vector<128x128xbf16>, vector<8x128xf32> -> vector<8x128xf32>
    %c0_13 = arith.constant 0 : index
    %c0_14 = arith.constant 0 : index
    %17 = vector.load %arg7[%c0_13, %c0_14] : memref<1x128xf32, #tpu.memory_space<vmem>>, vector<1x128xf32>
    %18 = vector.broadcast %17 : vector<1x128xf32> to vector<8x128xf32>
    %19 = arith.addf %16, %18 : vector<8x128xf32>
    %20 = arith.truncf %19 : vector<8x128xf32> to vector<8x128xbf16>
    %c0_15 = arith.constant 0 : index
    %c0_16 = arith.constant 0 : index
    %21 = vector.load %arg8[%c0_15, %c0_16] : memref<8x128xbf16, #tpu.memory_space<vmem>>, vector<8x128xbf16>
    tpu.vector_store %arg8[%c0_15, %c0_16], %20 {strides = array<i32>} : memref<8x128xbf16, #tpu.memory_space<vmem>>, vector<8x128xbf16>,
    return
  }
  func.func @transform_0(%arg0: i32) -> (i32, i32) {
    %c0_i32 = arith.constant 0 : i32
    %c0_i32_0 = arith.constant 0 : i32
    return %arg0, %c0_i32 : i32, i32
  }
  func.func @transform_1(%arg0: i32) -> (i32, i32) {
    %c0_i32 = arith.constant 0 : i32
    %c0_i32_0 = arith.constant 0 : i32
    %c0_i32_1 = arith.constant 0 : i32
    return %c0_i32, %c0_i32_0 : i32, i32
  }
  func.func @transform_2(%arg0: i32) -> (i32, i32) {
    %c0_i32 = arith.constant 0 : i32
    %c0_i32_0 = arith.constant 0 : i32
    %c0_i32_1 = arith.constant 0 : i32
    return %c0_i32, %c0_i32_0 : i32, i32
  }
  func.func @transform_3(%arg0: i32) -> (i32, i32) {
    %c0_i32 = arith.constant 0 : i32
    %c0_i32_0 = arith.constant 0 : i32
    %c0_i32_1 = arith.constant 0 : i32
    return %c0_i32, %c0_i32_0 : i32, i32
  }
  func.func @transform_4(%arg0: i32) -> (i32, i32) {
    %c0_i32 = arith.constant 0 : i32
    %c0_i32_0 = arith.constant 0 : i32
    %c0_i32_1 = arith.constant 0 : i32
    return %c0_i32, %c0_i32_0 : i32, i32
  }
  func.func @transform_5(%arg0: i32) -> (i32, i32) {
    %c0_i32 = arith.constant 0 : i32
    %c0_i32_0 = arith.constant 0 : i32
    %c0_i32_1 = arith.constant 0 : i32
    return %c0_i32, %c0_i32_0 : i32, i32
  }
  func.func @transform_6(%arg0: i32) -> (i32, i32) {
    %c0_i32 = arith.constant 0 : i32
    %c0_i32_0 = arith.constant 0 : i32
    %c0_i32_1 = arith.constant 0 : i32
    return %c0_i32, %c0_i32_0 : i32, i32
  }
  func.func @transform_7(%arg0: i32) -> (i32, i32) {
    %c0_i32 = arith.constant 0 : i32
    %c0_i32_0 = arith.constant 0 : i32
    return %arg0, %c0_i32 : i32, i32
  }
}

</mosaic_0001>

<llo_original>
// kernel: _lambda_.1
$region0: #{_lambda_.1}
  #allocation0 [shape = 'u32[]', space=smem, size = 0x4, offset = 0x4, fixed_abs, tag = 'smem constant byte address 0x4 - core index']
  #allocation1 [shape = 'u32[144,128]{1,0:T(1,128)}', space=vmem, size = 0x12000, scoped, tag = 'internal scratch']
  %s0 = inlined_call_operand.vmem [shape: bf16[8,16], index: 0, kind: input, shape index: {}]
  %s1 = inlined_call_operand.vmem [shape: bf16[16,128], index: 1, kind: input, shape index: {}]
  %s2 = inlined_call_operand.vmem [shape: f32[1,128], index: 2, kind: input, shape index: {}]
  %s3 = inlined_call_operand.hbm [shape: bf16[128,128], index: 3, kind: input, shape index: {}]
  %s4 = inlined_call_operand.vmem [shape: f32[1,128], index: 4, kind: input, shape index: {}]
  %s5 = inlined_call_operand.hbm [shape: bf16[128,128], index: 5, kind: input, shape index: {}]
  %s6 = inlined_call_operand.vmem [shape: f32[1,128], index: 6, kind: input, shape index: {}]
  %s7 = inlined_call_operand.vmem [shape: bf16[8,128], index: 7, kind: output, shape index: {}]
  %s8 = sld [smem:[#allocation0]]
  $region46: #{_lambda_.1} parent=0
    _
  %s10 = ssub.s32 1, %s8
  %s11 = scalar_select 0, %s10, %s8
  $region1: #{_lambda_.1} parent=0
    #allocation2 [shape = 'u8[32768]{0}', space=vmem, size = 0x8000, scoped, tag = 'input window, operand 3, single buffered']
    #allocation3 [shape = 's32[1]{0}', space=sflag, size = 0x4, scoped, tag = 'scoped memory for _lambda_.1']
    #allocation4 [shape = 'u8[32768]{0}', space=vmem, size = 0x8000, scoped, tag = 'input window, operand 5, single buffered']
    #allocation5 [shape = 's32[1]{0}', space=sflag, size = 0x4, scoped, tag = 'scoped memory for _lambda_.1']
    %12 = vsyncpa [#allocation3], 0
    %13 = vsyncpa [#allocation5], 0
    // Predicated region
    $region2: #{_lambda_.1} parent=1 // pred_check
      _
    $region3: #{_lambda_.1} parent=1 // pred_check_branch
      %15 = sbr.rel (0) target = $region5
    $region4: #{_lambda_.1} parent=1 // pred_region
      _
    $region5: #{_lambda_.1} parent=1 // pred_fallthru
      _
    // Predicated region
    $region6: #{_lambda_.1} parent=1 // pred_check
      _
    $region7: #{_lambda_.1} parent=1 // pred_check_branch
      %17 = sbr.rel (0) target = $region9
    $region8: #{_lambda_.1} parent=1 // pred_region
      _
    $region9: #{_lambda_.1} parent=1 // pred_fallthru
      _
    // Predicated region
    $region10: #{_lambda_.1} parent=1 // pred_check
      _
    $region11: #{_lambda_.1} parent=1 // pred_check_branch
      %19 = sbr.rel (0) target = $region13
    $region12: #{_lambda_.1} parent=1 // pred_region
      _
    $region13: #{_lambda_.1} parent=1 // pred_fallthru
      _
    // Predicated region
    $region14: #{_lambda_.1} parent=1 // pred_check
      _
    $region15: #{_lambda_.1} parent=1 // pred_check_branch
      %21 = sbr.rel (0) target = $region17
    $region16: #{_lambda_.1} parent=1 // pred_region
      %s23 = ssub.s32 1024, 1024
      %24 = vsyncadd [#allocation3], %s23
      %s25 = sshll.u32 [#allocation2], 4
      %s26 = int_to_ptr.vmem [resolvable:$true] %s25
      %31 = dma.hbm_to_vmem [thread:$0]  %s3, 1024, %s26, [#allocation3], 64, 64, 4
    $region17: #{_lambda_.1} parent=1 // pred_fallthru
      _
    // Predicated region
    $region18: #{_lambda_.1} parent=1 // pred_check
      _
    $region19: #{_lambda_.1} parent=1 // pred_check_branch
      %33 = sbr.rel (0) target = $region21
    $region20: #{_lambda_.1} parent=1 // pred_region
      _
    $region21: #{_lambda_.1} parent=1 // pred_fallthru
      _
    // Predicated region
    $region22: #{_lambda_.1} parent=1 // pred_check
      _
    $region23: #{_lambda_.1} parent=1 // pred_check_branch
      %35 = sbr.rel (0) target = $region25
    $region24: #{_lambda_.1} parent=1 // pred_region
      %s37 = ssub.s32 1024, 1024
      %38 = vsyncadd [#allocation5], %s37
      %s39 = sshll.u32 [#allocation4], 4
      %s40 = int_to_ptr.vmem [resolvable:$true] %s39
      %45 = dma.hbm_to_vmem [thread:$0]  %s5, 1024, %s40, [#allocation5], 64, 64, 4
    $region25: #{_lambda_.1} parent=1 // pred_fallthru
      _
    // Predicated region
    $region26: #{_lambda_.1} parent=1 // pred_check
      _
    $region27: #{_lambda_.1} parent=1 // pred_check_branch
      %47 = sbr.rel (0) target = $region29
    $region28: #{_lambda_.1} parent=1 // pred_region
      _
    $region29: #{_lambda_.1} parent=1 // pred_fallthru
      _
    // Predicated region
    $region30: #{_lambda_.1} parent=1 // pred_check
      _
    $region31: #{_lambda_.1} parent=1 // pred_check_branch
      %49 = sbr.rel (0) target = $region33
    $region32: #{_lambda_.1} parent=1 // pred_region
      %50 = dma.done [#allocation3], 1024
    $region33: #{_lambda_.1} parent=1 // pred_fallthru
      _
    // Predicated region
    $region34: #{_lambda_.1} parent=1 // pred_check
      _
    $region35: #{_lambda_.1} parent=1 // pred_check_branch
      %52 = sbr.rel (0) target = $region37
    $region36: #{_lambda_.1} parent=1 // pred_region
      %53 = dma.done [#allocation5], 1024
    $region37: #{_lambda_.1} parent=1 // pred_fallthru
      _
    %v55 = vld [vmem:[%s0] sm:$0xf]
    %v56 = vld [vmem:[%s1] sm:$0xf]
    %v57 = vld [vmem:[%s1 + $0x4] sm:$0xf]
    %v58 = vld [vmem:[%s2] sm:$0x1]
    %v60 = vlaneseq
    %v61 = vshrl.u32 %v60, 7
    %v62 = vsub.s32 0, %v61
    %v63 = vrot.slane %v58, %v62
    %v67 = vunpack.c.l.b16 %v56
    %v68 = vunpack.c.l.b16 %v57
    %v69 = vpack.c.b16 %v68, %v67
    %vm71 = vcmask 130048
    %v73 = vsel %vm71, %v55, 0
    %75 = vmatprep.subr.bf16.mxu0 0
    %76 = vmatpush1.bf16.msra.mxu0 %v69
    %77 = vmatprep.subr.bf16.mxu0 0
    %78 = vmatpush1.bf16.msra.mxu0 0
    %79 = vmatprep.subr.bf16.mxu0 0
    %80 = vmatpush1.bf16.msra.mxu0 0
    %81 = vmatprep.subr.bf16.mxu0 0
    %82 = vmatpush1.bf16.msra.mxu0 0
    %83 = vmatprep.subr.bf16.mxu0 0
    %84 = vmatpush1.bf16.msra.mxu0 0
    %85 = vmatprep.subr.bf16.mxu0 0
    %86 = vmatpush1.bf16.msra.mxu0 0
    %87 = vmatprep.subr.bf16.mxu0 0
    %88 = vmatpush1.bf16.msra.mxu0 0
    %89 = vmatprep.subr.bf16.mxu0 0
    %90 = vmatpush1.bf16.msra.mxu0 0
    %91 = vmatprep.subr.bf16.mxu0 0
    %92 = vmatpush1.bf16.msra.mxu0 0
    %93 = vmatprep.subr.bf16.mxu0 0
    %94 = vmatpush1.bf16.msra.mxu0 0
    %95 = vmatprep.subr.bf16.mxu0 0
    %96 = vmatpush1.bf16.msra.mxu0 0
    %97 = vmatprep.subr.bf16.mxu0 0
    %98 = vmatpush1.bf16.msra.mxu0 0
    %99 = vmatprep.subr.bf16.mxu0 0
    %100 = vmatpush1.bf16.msra.mxu0 0
    %101 = vmatprep.subr.bf16.mxu0 0
    %102 = vmatpush1.bf16.msra.mxu0 0
    %103 = vmatprep.subr.bf16.mxu0 0
    %104 = vmatpush1.bf16.msra.mxu0 0
    %105 = vmatprep.subr.bf16.mxu0 0
    %106 = vmatpush1.bf16.msra.mxu0 0
    %107 = vmatprep.mubr.bf16.mxu0 0
    %108 = vmatmul.mubr.bf16.gmra.mrb[0].mxu0 %v73
    %v109 = vpop.f32.mrb[0].mxu0
    %v110 = vadd.f32 %v63, %v109
    %v111 = vpop.f32.mrb[0].mxu0
    %v112 = vpop.f32.mrb[0].mxu0
    %v113 = vpop.f32.mrb[0].mxu0
    %114 = vdwg.mxu0
    %v115 = vtanh.pop %v110
    %v116 = vpack.c.bf16 %v115, %v115
    %v117 = vld [vmem:[#allocation2] sm:$0xf]
    %v118 = vld [vmem:[#allocation2 + $0x4] sm:$0xf]
    %v119 = vld [vmem:[#allocation2 + $0x8] sm:$0xf]
    %v120 = vld [vmem:[#allocation2 + $0xc] sm:$0xf]
    %v121 = vld [vmem:[#allocation2 + $0x10] sm:$0xf]
    %v122 = vld [vmem:[#allocation2 + $0x14] sm:$0xf]
    %v123 = vld [vmem:[#allocation2 + $0x18] sm:$0xf]
    %v124 = vld [vmem:[#allocation2 + $0x1c] sm:$0xf]
    %v125 = vld [vmem:[#allocation2 + $0x20] sm:$0xf]
    %v126 = vld [vmem:[#allocation2 + $0x24] sm:$0xf]
    %v127 = vld [vmem:[#allocation2 + $0x28] sm:$0xf]
    %v128 = vld [vmem:[#allocation2 + $0x2c] sm:$0xf]
    %v129 = vld [vmem:[#allocation2 + $0x30] sm:$0xf]
    %v130 = vld [vmem:[#allocation2 + $0x34] sm:$0xf]
    %v131 = vld [vmem:[#allocation2 + $0x38] sm:$0xf]
    %v132 = vld [vmem:[#allocation2 + $0x3c] sm:$0xf]
    %v133 = vld [vmem:[%s4] sm:$0x1]
    %v135 = vlaneseq
    %v136 = vshrl.u32 %v135, 7
    %v137 = vsub.s32 0, %v136
    %v138 = vrot.slane %v133, %v137
    %v156 = vunpack.c.l.b16 %v117
    %v157 = vunpack.c.l.b16 %v118
    %v158 = vunpack.c.l.b16 %v119
    %v159 = vunpack.c.l.b16 %v120
    %v160 = vunpack.c.l.b16 %v121
    %v161 = vunpack.c.l.b16 %v122
    %v162 = vunpack.c.l.b16 %v123
    %v163 = vunpack.c.l.b16 %v124
    %v164 = vunpack.c.l.b16 %v125
    %v165 = vunpack.c.l.b16 %v126
    %v166 = vunpack.c.l.b16 %v127
    %v167 = vunpack.c.l.b16 %v128
    %v168 = vunpack.c.l.b16 %v129
    %v169 = vunpack.c.l.b16 %v130
    %v170 = vunpack.c.l.b16 %v131
    %v171 = vunpack.c.l.b16 %v132
    %v172 = vpack.c.b16 %v157, %v156
    %v173 = vpack.c.b16 %v159, %v158
    %v174 = vpack.c.b16 %v161, %v160
    %v175 = vpack.c.b16 %v163, %v162
    %v176 = vpack.c.b16 %v165, %v164
    %v177 = vpack.c.b16 %v167, %v166
    %v178 = vpack.c.b16 %v169, %v168
    %v179 = vpack.c.b16 %v171, %v170
    %188 = vmatprep.subr.bf16.mxu0 0
    %189 = vmatpush1.bf16.msra.mxu0 %v172
    %190 = vmatprep.subr.bf16.mxu0 0
    %191 = vmatpush1.bf16.msra.mxu0 %v173
    %192 = vmatprep.subr.bf16.mxu0 0
    %193 = vmatpush1.bf16.msra.mxu0 %v174
    %194 = vmatprep.subr.bf16.mxu0 0
    %195 = vmatpush1.bf16.msra.mxu0 %v175
    %196 = vmatprep.subr.bf16.mxu0 0
    %197 = vmatpush1.bf16.msra.mxu0 %v176
    %198 = vmatprep.subr.bf16.mxu0 0
    %199 = vmatpush1.bf16.msra.mxu0 %v177
    %200 = vmatprep.subr.bf16.mxu0 0
    %201 = vmatpush1.bf16.msra.mxu0 %v178
    %202 = vmatprep.subr.bf16.mxu0 0
    %203 = vmatpush1.bf16.msra.mxu0 %v179
    %204 = vmatprep.subr.bf16.mxu0 0
    %205 = vmatpush1.bf16.msra.mxu0 0
    %206 = vmatprep.subr.bf16.mxu0 0
    %207 = vmatpush1.bf16.msra.mxu0 0
    %208 = vmatprep.subr.bf16.mxu0 0
    %209 = vmatpush1.bf16.msra.mxu0 0
    %210 = vmatprep.subr.bf16.mxu0 0
    %211 = vmatpush1.bf16.msra.mxu0 0
    %212 = vmatprep.subr.bf16.mxu0 0
    %213 = vmatpush1.bf16.msra.mxu0 0
    %214 = vmatprep.subr.bf16.mxu0 0
    %215 = vmatpush1.bf16.msra.mxu0 0
    %216 = vmatprep.subr.bf16.mxu0 0
    %217 = vmatpush1.bf16.msra.mxu0 0
    %218 = vmatprep.subr.bf16.mxu0 0
    %219 = vmatpush1.bf16.msra.mxu0 0
    %220 = vmatprep.mubr.bf16.mxu0 0
    %221 = vmatmul.mubr.bf16.gmra.mrb[0].mxu0 %v116
    %v222 = vpop.f32.mrb[0].mxu0
    %v223 = vadd.f32 %v138, %v222
    %v224 = vpop.f32.mrb[0].mxu0
    %v225 = vpop.f32.mrb[0].mxu0
    %v226 = vpop.f32.mrb[0].mxu0
    %227 = vdwg.mxu0
    %v228 = vtanh.pop %v223
    %v229 = vpack.c.bf16 %v228, %v228
    %v230 = vld [vmem:[#allocation4] sm:$0xf]
    %v231 = vld [vmem:[#allocation4 + $0x4] sm:$0xf]
    %v232 = vld [vmem:[#allocation4 + $0x8] sm:$0xf]
    %v233 = vld [vmem:[#allocation4 + $0xc] sm:$0xf]
    %v234 = vld [vmem:[#allocation4 + $0x10] sm:$0xf]
    %v235 = vld [vmem:[#allocation4 + $0x14] sm:$0xf]
    %v236 = vld [vmem:[#allocation4 + $0x18] sm:$0xf]
    %v237 = vld [vmem:[#allocation4 + $0x1c] sm:$0xf]
    %v238 = vld [vmem:[#allocation4 + $0x20] sm:$0xf]
    %v239 = vld [vmem:[#allocation4 + $0x24] sm:$0xf]
    %v240 = vld [vmem:[#allocation4 + $0x28] sm:$0xf]
    %v241 = vld [vmem:[#allocation4 + $0x2c] sm:$0xf]
    %v242 = vld [vmem:[#allocation4 + $0x30] sm:$0xf]
    %v243 = vld [vmem:[#allocation4 + $0x34] sm:$0xf]
    %v244 = vld [vmem:[#allocation4 + $0x38] sm:$0xf]
    %v245 = vld [vmem:[#allocation4 + $0x3c] sm:$0xf]
    %v246 = vld [vmem:[%s6] sm:$0x1]
    %v248 = vlaneseq
    %v249 = vshrl.u32 %v248, 7
    %v250 = vsub.s32 0, %v249
    %v251 = vrot.slane %v246, %v250
    %v269 = vunpack.c.l.b16 %v230
    %v270 = vunpack.c.l.b16 %v231
    %v271 = vunpack.c.l.b16 %v232
    %v272 = vunpack.c.l.b16 %v233
    %v273 = vunpack.c.l.b16 %v234
    %v274 = vunpack.c.l.b16 %v235
    %v275 = vunpack.c.l.b16 %v236
    %v276 = vunpack.c.l.b16 %v237
    %v277 = vunpack.c.l.b16 %v238
    %v278 = vunpack.c.l.b16 %v239
    %v279 = vunpack.c.l.b16 %v240
    %v280 = vunpack.c.l.b16 %v241
    %v281 = vunpack.c.l.b16 %v242
    %v282 = vunpack.c.l.b16 %v243
    %v283 = vunpack.c.l.b16 %v244
    %v284 = vunpack.c.l.b16 %v245
    %v285 = vpack.c.b16 %v270, %v269
    %v286 = vpack.c.b16 %v272, %v271
    %v287 = vpack.c.b16 %v274, %v273
    %v288 = vpack.c.b16 %v276, %v275
    %v289 = vpack.c.b16 %v278, %v277
    %v290 = vpack.c.b16 %v280, %v279
    %v291 = vpack.c.b16 %v282, %v281
    %v292 = vpack.c.b16 %v284, %v283
    %301 = vmatprep.subr.bf16.mxu0 0
    %302 = vmatpush1.bf16.msra.mxu0 %v285
    %303 = vmatprep.subr.bf16.mxu0 0
    %304 = vmatpush1.bf16.msra.mxu0 %v286
    %305 = vmatprep.subr.bf16.mxu0 0
    %306 = vmatpush1.bf16.msra.mxu0 %v287
    %307 = vmatprep.subr.bf16.mxu0 0
    %308 = vmatpush1.bf16.msra.mxu0 %v288
    %309 = vmatprep.subr.bf16.mxu0 0
    %310 = vmatpush1.bf16.msra.mxu0 %v289
    %311 = vmatprep.subr.bf16.mxu0 0
    %312 = vmatpush1.bf16.msra.mxu0 %v290
    %313 = vmatprep.subr.bf16.mxu0 0
    %314 = vmatpush1.bf16.msra.mxu0 %v291
    %315 = vmatprep.subr.bf16.mxu0 0
    %316 = vmatpush1.bf16.msra.mxu0 %v292
    %317 = vmatprep.subr.bf16.mxu0 0
    %318 = vmatpush1.bf16.msra.mxu0 0
    %319 = vmatprep.subr.bf16.mxu0 0
    %320 = vmatpush1.bf16.msra.mxu0 0
    %321 = vmatprep.subr.bf16.mxu0 0
    %322 = vmatpush1.bf16.msra.mxu0 0
    %323 = vmatprep.subr.bf16.mxu0 0
    %324 = vmatpush1.bf16.msra.mxu0 0
    %325 = vmatprep.subr.bf16.mxu0 0
    %326 = vmatpush1.bf16.msra.mxu0 0
    %327 = vmatprep.subr.bf16.mxu0 0
    %328 = vmatpush1.bf16.msra.mxu0 0
    %329 = vmatprep.subr.bf16.mxu0 0
    %330 = vmatpush1.bf16.msra.mxu0 0
    %331 = vmatprep.subr.bf16.mxu0 0
    %332 = vmatpush1.bf16.msra.mxu0 0
    %333 = vmatprep.mubr.bf16.mxu0 0
    %334 = vmatmul.mubr.bf16.gmra.mrb[0].mxu0 %v229
    %v335 = vpop.f32.mrb[0].mxu0
    %v336 = vadd.f32 %v251, %v335
    %v337 = vpop.f32.mrb[0].mxu0
    %v338 = vpop.f32.mrb[0].mxu0
    %v339 = vpop.f32.mrb[0].mxu0
    %340 = vdwg.mxu0
    %v341 = vpack.c.bf16 %v336, %v336
    %342 = vst [vmem:[%s7] sm:$0xf] %v341
    // Predicated region
    $region38: #{_lambda_.1} parent=1 // pred_check
      _
    $region39: #{_lambda_.1} parent=1 // pred_check_branch
      %344 = sbr.rel (0) target = $region41
    $region40: #{_lambda_.1} parent=1 // pred_region
      _
    $region41: #{_lambda_.1} parent=1 // pred_fallthru
      _
    // Predicated region
    $region42: #{_lambda_.1} parent=1 // pred_check
      _
    $region43: #{_lambda_.1} parent=1 // pred_check_branch
      %346 = sbr.rel (0) target = $region45
    $region44: #{_lambda_.1} parent=1 // pred_region
      _
    $region45: #{_lambda_.1} parent=1 // pred_fallthru
      _
    %347 = vsyncpa [#allocation3], 1
    %348 = vsyncpa [#allocation5], 1

</llo_original>
